<compile_context>
chip_gen: v5e
topology: v5e:2x2
jax: 0.10.0
libtpu: 0.0.40
codegen_flags: <defaults>
</compile_context>

<pallas_src>
import functools

import jax
import jax.numpy as jnp
from jax.experimental import pallas as pl
from jax.experimental.pallas import tpu as pltpu

LANES = 128
SUBLANES = 8
MAX_TILE_ROWS = 4096  # (4096,128) f32 tile = 2 MiB; 2 inputs x 2 bufs = 8 MiB


def _mean_bce_kernel(pred_ref, tgt_ref, sum_ref, cnt_ref, *,
                     tile_rows, steps_per_group, total_tiles, last_tile_rows):
    """Accumulate masked log-likelihood sum and mask count into (8,128) accums.

    Grid: (num_groups [parallel], steps_per_group [arbitrary reduction]).
    sum_ref / cnt_ref blocks are indexed only by the group axis, so they stay
    resident across the reduction axis and act as accumulators.
    """
    i = pl.program_id(0)  # parallel group (row-range)
    k = pl.program_id(1)  # reduction step within the group

    @pl.when(k == 0)
    def _():
        sum_ref[...] = jnp.zeros_like(sum_ref)
        cnt_ref[...] = jnp.zeros_like(cnt_ref)

    p = pred_ref[...].astype(jnp.float32)
    t = tgt_ref[...].astype(jnp.float32)

    # Only the globally-last tile can be ragged.  If it is (static check),
    # fold the bounds into `t` so a single `t >= 0` mask suffices below.
    # Fully-tiled inputs emit no bounds code at all.
    if last_tile_rows != tile_rows:
        tile_idx = i * steps_per_group + k
        limit = jnp.where(tile_idx == total_tiles - 1, last_tile_rows, tile_rows)
        row = jax.lax.broadcasted_iota(jnp.int32, t.shape, 0)
        t = jnp.where(row < limit, t, -1.0)

    mask = t >= 0.0

    # PyTorch binary_cross_entropy clamps log outputs at -100.
    log_p = jnp.maximum(jnp.log(p), -100.0)
    log_1mp = jnp.maximum(jnp.log(1.0 - p), -100.0)
    # log-likelihood: t*log_p + (1-t)*log_1mp == log_1mp + t*(log_p - log_1mp)
    # (the leading negation is hoisted to the wrapper's final scalar).
    ll = log_1mp + t * (log_p - log_1mp)

    # Keep the select (NOT `ll * mask_float`): ragged/stale tiles can carry
    # NaN/Inf through the log path and NaN*0 would poison the accumulator.
    ll_masked = jnp.where(mask, ll, 0.0)

    # Fold (tile_rows, 128) into the (8, 128) accumulators with pure VPU adds
    # (no per-step cross-lane XLU reduce, no scalar store).
    sum_ref[0] += jnp.sum(ll_masked.reshape(-1, SUBLANES, LANES), axis=0)
    cnt_ref[0] += jnp.sum(
        mask.astype(jnp.float32).reshape(-1, SUBLANES, LANES), axis=0)


@jax.jit
def mean_bce_loss(predictions, targets):
    """predictions, targets: same shape, any rank. Returns scalar f32 loss."""
    assert predictions.shape == targets.shape
    n = predictions.size

    p = predictions.reshape(-1)
    t = targets.reshape(-1)

    # Lane alignment: the kernel streams a (rows, 128) view.  When n is a
    # multiple of 128 the reshape is a free bitcast and NO pad/copy happens
    # (ragged multiple-of-1024 remainders are handled in-kernel).  Only
    # non-lane-aligned or tiny (<1024) inputs take this rare pad-copy path.
    padded_n = max(-(-n // LANES) * LANES, SUBLANES * LANES)
    if padded_n != n:
        p = jnp.pad(p, (0, padded_n - n), constant_values=0.5)   # benign prob
        t = jnp.pad(t, (0, padded_n - n), constant_values=-1.0)  # masked out

    rows = padded_n // LANES                                     # >= 8
    p2 = p.reshape(rows, LANES)
    t2 = t.reshape(rows, LANES)

    tile_rows = min(MAX_TILE_ROWS, (rows // SUBLANES) * SUBLANES)  # mult of 8
    total_tiles = -(-rows // tile_rows)
    last_tile_rows = rows - (total_tiles - 1) * tile_rows

    # Exact split (no duplicated tail tile): 2 groups -> one per v7x
    # TensorCore when they divide evenly; otherwise a single group.
    num_groups = 2 if (total_tiles >= 2 and total_tiles % 2 == 0) else 1
    steps = total_tiles // num_groups

    kernel = functools.partial(
        _mean_bce_kernel,
        tile_rows=tile_rows,
        steps_per_group=steps,
        total_tiles=total_tiles,
        last_tile_rows=last_tile_rows,
    )

    in_map = lambda i, k: (i * steps + k, 0)
    out_map = lambda i, k: (i, 0, 0)

    in_bytes = (jnp.dtype(p2.dtype).itemsize + jnp.dtype(t2.dtype).itemsize)
    cost = pl.CostEstimate(
        flops=12 * padded_n,
        transcendentals=2 * padded_n,
        bytes_accessed=padded_n * in_bytes
        + 2 * num_groups * SUBLANES * LANES * 4,
    )

    sum_out, cnt_out = pl.pallas_call(
        kernel,
        out_shape=(
            jax.ShapeDtypeStruct((num_groups, SUBLANES, LANES), jnp.float32),
            jax.ShapeDtypeStruct((num_groups, SUBLANES, LANES), jnp.float32),
        ),
        grid_spec=pltpu.PrefetchScalarGridSpec(
            num_scalar_prefetch=0,
            grid=(num_groups, steps),
            in_specs=[
                pl.BlockSpec((tile_rows, LANES), in_map),
                pl.BlockSpec((tile_rows, LANES), in_map),
            ],
            out_specs=[
                pl.BlockSpec((1, SUBLANES, LANES), out_map),
                pl.BlockSpec((1, SUBLANES, LANES), out_map),
            ],
        ),
        compiler_params=pltpu.CompilerParams(
            dimension_semantics=("parallel", "arbitrary"),
        ),
        cost_estimate=cost,
    )(p2, t2)

    # Tiny final cross-group / cross-lane reduce + negate + divide.
    return -jnp.sum(sum_out) / jnp.sum(cnt_out)


def _reference(predictions, targets):
    p = predictions.reshape(-1).astype(jnp.float32)
    t = targets.reshape(-1).astype(jnp.float32)
    mask = t >= 0.0
    log_p = jnp.maximum(jnp.log(p), -100.0)
    log_1mp = jnp.maximum(jnp.log(1.0 - p), -100.0)
    bce = -(t * log_p + (1.0 - t) * log_1mp)
    return jnp.sum(jnp.where(mask, bce, 0.0)) / jnp.sum(mask.astype(jnp.float32))


def _make_inputs(key, shape):
    k1, k2, k3 = jax.random.split(key, 3)
    # Predictions must be probabilities in (0, 1) for BCE.
    predictions = jax.random.uniform(k1, shape, minval=1e-4, maxval=1.0 - 1e-4)
    # Targets in [0, 1], with some entries set to -1 (ignored by the mask).
    targets = jax.random.uniform(k2, shape, minval=0.0, maxval=1.0)
    ignore = jax.random.bernoulli(k3, p=0.3, shape=shape)
    targets = jnp.where(ignore, -1.0, targets)
    return predictions, targets


if __name__ == "__main__":
    key = jax.random.PRNGKey(0)
    k_main, k_ragged, k_pad = jax.random.split(key, 3)

    # Main shape (NCHW, as in the PyTorch module): n = 2048, fully aligned.
    predictions, targets = _make_inputs(k_main, (2, 4, 16, 16))
    loss = mean_bce_loss(predictions, targets)
    jax.block_until_ready(loss)
    ref = _reference(predictions, targets)
    assert jnp.allclose(loss, ref, rtol=1e-5, atol=1e-5), (loss, ref)

    # Lane-aligned but not a multiple of 1024: ragged last tile, no pad copy.
    p_r, t_r = _make_inputs(k_ragged, (2, 3, 16, 16))      # n = 1536
    assert jnp.allclose(mean_bce_loss(p_r, t_r), _reference(p_r, t_r),
                        rtol=1e-5, atol=1e-5)

    # Not lane-aligned: rare small-pad fallback path.
    p_u, t_u = _make_inputs(k_pad, (3, 5, 7, 11))          # n = 1155
    assert jnp.allclose(mean_bce_loss(p_u, t_u), _reference(p_u, t_u),
                        rtol=1e-5, atol=1e-5)

    print("KERNEL_OK")
</pallas_src>

<mosaic_0001>
module attributes {stable_mosaic.version = 11 : i64} {
  func.func @_mean_bce_kernel(%arg0: i32, %arg1: i32, %arg2: memref<16x128xf32, #tpu.memory_space<vmem>>, %arg3: memref<16x128xf32, #tpu.memory_space<vmem>>, %arg4: memref<1x8x128xf32, #tpu.memory_space<vmem>>, %arg5: memref<1x8x128xf32, #tpu.memory_space<vmem>>) attributes {dimension_semantics = [#tpu.dimension_semantics<parallel>, #tpu.dimension_semantics<arbitrary>], iteration_bounds = array<i64: 1, 1>, scalar_prefetch = 0 : i64, scratch_operands = 0 : i64, tpu.core_type = #tpu.core_type<tc>, window_params = [{transform_indices = @transform_0, window_bounds = array<i64: 16, 128>}, {transform_indices = @transform_1, window_bounds = array<i64: 16, 128>}, {transform_indices = @transform_2, window_bounds = array<i64: 1, 8, 128>}, {transform_indices = @transform_3, window_bounds = array<i64: 1, 8, 128>}]} {
    %c0_i32 = arith.constant 0 : i32
    %0 = arith.cmpi eq, %arg1, %c0_i32 : i32
    %1 = arith.extui %0 : i1 to i32
    %c0_i32_0 = arith.constant 0 : i32
    %2 = arith.cmpi ne, %1, %c0_i32_0 : i32
    scf.if %2 {
      %cst_22 = arith.constant 0.000000e+00 : f32
      %38 = vector.broadcast %cst_22 : f32 to vector<1x8x128xf32>
      %c0_23 = arith.constant 0 : index
      %c0_24 = arith.constant 0 : index
      %c0_25 = arith.constant 0 : index
      %39 = vector.load %arg4[%c0_23, %c0_24, %c0_25] : memref<1x8x128xf32, #tpu.memory_space<vmem>>, vector<1x8x128xf32>
      tpu.vector_store %arg4[%c0_23, %c0_24, %c0_25], %38 {strides = array<i32>} : memref<1x8x128xf32, #tpu.memory_space<vmem>>, vector<1x8x128xf32>,
      %cst_26 = arith.constant 0.000000e+00 : f32
      %40 = vector.broadcast %cst_26 : f32 to vector<1x8x128xf32>
      %c0_27 = arith.constant 0 : index
      %c0_28 = arith.constant 0 : index
      %c0_29 = arith.constant 0 : index
      %41 = vector.load %arg5[%c0_27, %c0_28, %c0_29] : memref<1x8x128xf32, #tpu.memory_space<vmem>>, vector<1x8x128xf32>
      tpu.vector_store %arg5[%c0_27, %c0_28, %c0_29], %40 {strides = array<i32>} : memref<1x8x128xf32, #tpu.memory_space<vmem>>, vector<1x8x128xf32>,
    } else {
    }
    %c0 = arith.constant 0 : index
    %c0_1 = arith.constant 0 : index
    %3 = vector.load %arg2[%c0, %c0_1] : memref<16x128xf32, #tpu.memory_space<vmem>>, vector<16x128xf32>
    %c0_2 = arith.constant 0 : index
    %c0_3 = arith.constant 0 : index
    %4 = vector.load %arg3[%c0_2, %c0_3] : memref<16x128xf32, #tpu.memory_space<vmem>>, vector<16x128xf32>
    %cst = arith.constant 0.000000e+00 : f32
    %5 = vector.broadcast %cst : f32 to vector<16x128xf32>
    %6 = arith.cmpf oge, %4, %5 : vector<16x128xf32>
    %7 = math.log %3 : vector<16x128xf32>
    %cst_4 = arith.constant -1.000000e+02 : f32
    %8 = vector.broadcast %cst_4 : f32 to vector<16x128xf32>
    %9 = arith.maximumf %7, %8 : vector<16x128xf32>
    %cst_5 = arith.constant 1.000000e+00 : f32
    %10 = vector.broadcast %cst_5 : f32 to vector<16x128xf32>
    %11 = arith.subf %10, %3 : vector<16x128xf32>
    %12 = math.log %11 : vector<16x128xf32>
    %cst_6 = arith.constant -1.000000e+02 : f32
    %13 = vector.broadcast %cst_6 : f32 to vector<16x128xf32>
    %14 = arith.maximumf %12, %13 : vector<16x128xf32>
    %15 = arith.subf %9, %14 : vector<16x128xf32>
    %16 = arith.mulf %4, %15 : vector<16x128xf32>
    %17 = arith.addf %14, %16 : vector<16x128xf32>
    %cst_7 = arith.constant 0.000000e+00 : f32
    %18 = vector.broadcast %cst_7 : f32 to vector<16x128xf32>
    %19 = arith.select %6, %17, %18 : vector<16x128xi1>, vector<16x128xf32>
    %c0_8 = arith.constant 0 : index
    %c0_9 = arith.constant 0 : index
    %c0_10 = arith.constant 0 : index
    %20 = vector.load %arg4[%c0_8, %c0_9, %c0_10] : memref<1x8x128xf32, #tpu.memory_space<vmem>>, vector<1x8x128xf32>
    %21 = vector.shape_cast %20 : vector<1x8x128xf32> to vector<8x128xf32>
    %22 = vector.shape_cast %19 : vector<16x128xf32> to vector<2x8x128xf32>
    %cst_11 = arith.constant dense<0.000000e+00> : vector<8x128xf32>
    %23 = vector.multi_reduction <add>, %22, %cst_11 [0] : vector<2x8x128xf32> to vector<8x128xf32>
    %24 = arith.addf %21, %23 : vector<8x128xf32>
    %c0_12 = arith.constant 0 : index
    %c0_13 = arith.constant 0 : index
    %c0_14 = arith.constant 0 : index
    %25 = vector.load %arg4[%c0_12, %c0_13, %c0_14] : memref<1x8x128xf32, #tpu.memory_space<vmem>>, vector<1x8x128xf32>
    %26 = vector.shape_cast %25 : vector<1x8x128xf32> to vector<8x128xf32>
    %27 = vector.shape_cast %24 : vector<8x128xf32> to vector<1x8x128xf32>
    tpu.vector_store %arg4[%c0_12, %c0_13, %c0_14], %27 {strides = array<i32>} : memref<1x8x128xf32, #tpu.memory_space<vmem>>, vector<1x8x128xf32>,
    %c0_15 = arith.constant 0 : index
    %c0_16 = arith.constant 0 : index
    %c0_17 = arith.constant 0 : index
    %28 = vector.load %arg5[%c0_15, %c0_16, %c0_17] : memref<1x8x128xf32, #tpu.memory_space<vmem>>, vector<1x8x128xf32>
    %29 = vector.shape_cast %28 : vector<1x8x128xf32> to vector<8x128xf32>
    %30 = arith.extui %6 : vector<16x128xi1> to vector<16x128xi32>
    %31 = arith.sitofp %30 : vector<16x128xi32> to vector<16x128xf32>
    %32 = vector.shape_cast %31 : vector<16x128xf32> to vector<2x8x128xf32>
    %cst_18 = arith.constant dense<0.000000e+00> : vector<8x128xf32>
    %33 = vector.multi_reduction <add>, %32, %cst_18 [0] : vector<2x8x128xf32> to vector<8x128xf32>
    %34 = arith.addf %29, %33 : vector<8x128xf32>
    %c0_19 = arith.constant 0 : index
    %c0_20 = arith.constant 0 : index
    %c0_21 = arith.constant 0 : index
    %35 = vector.load %arg5[%c0_19, %c0_20, %c0_21] : memref<1x8x128xf32, #tpu.memory_space<vmem>>, vector<1x8x128xf32>
    %36 = vector.shape_cast %35 : vector<1x8x128xf32> to vector<8x128xf32>
    %37 = vector.shape_cast %34 : vector<8x128xf32> to vector<1x8x128xf32>
    tpu.vector_store %arg5[%c0_19, %c0_20, %c0_21], %37 {strides = array<i32>} : memref<1x8x128xf32, #tpu.memory_space<vmem>>, vector<1x8x128xf32>,
    return
  }
  func.func @transform_0(%arg0: i32, %arg1: i32) -> (i32, i32) {
    %c1_i32 = arith.constant 1 : i32
    %0 = arith.muli %arg0, %c1_i32 : i32
    %1 = arith.addi %0, %arg1 : i32
    %c0_i32 = arith.constant 0 : i32
    %c0_i32_0 = arith.constant 0 : i32
    return %1, %c0_i32 : i32, i32
  }
  func.func @transform_1(%arg0: i32, %arg1: i32) -> (i32, i32) {
    %c1_i32 = arith.constant 1 : i32
    %0 = arith.muli %arg0, %c1_i32 : i32
    %1 = arith.addi %0, %arg1 : i32
    %c0_i32 = arith.constant 0 : i32
    %c0_i32_0 = arith.constant 0 : i32
    return %1, %c0_i32 : i32, i32
  }
  func.func @transform_2(%arg0: i32, %arg1: i32) -> (i32, i32, i32) {
    %c0_i32 = arith.constant 0 : i32
    %c0_i32_0 = arith.constant 0 : i32
    %c0_i32_1 = arith.constant 0 : i32
    return %arg0, %c0_i32, %c0_i32_0 : i32, i32, i32
  }
  func.func @transform_3(%arg0: i32, %arg1: i32) -> (i32, i32, i32) {
    %c0_i32 = arith.constant 0 : i32
    %c0_i32_0 = arith.constant 0 : i32
    %c0_i32_1 = arith.constant 0 : i32
    return %arg0, %c0_i32, %c0_i32_0 : i32, i32, i32
  }
}

</mosaic_0001>

<llo_original>
// kernel: mean_bce_loss.1
$region0: #{mean_bce_loss.1}
  #allocation0 [shape = 'u32[]', space=smem, size = 0x4, offset = 0x4, fixed_abs, tag = 'smem constant byte address 0x4 - core index']
  #allocation1 [shape = 'u32[72,128]{1,0:T(1,128)}', space=vmem, size = 0x9000, scoped, tag = 'internal scratch']
  %s0 = inlined_call_operand.vmem [shape: f32[16,128], index: 0, kind: input, shape index: {}]
  %s1 = inlined_call_operand.vmem [shape: f32[16,128], index: 1, kind: input, shape index: {}]
  %s2 = inlined_call_operand.vmem [shape: f32[1,8,128], index: 2, kind: output, shape index: {0}]
  %s3 = inlined_call_operand.vmem [shape: f32[1,8,128], index: 3, kind: output, shape index: {1}]
  %4 = xla_tuple %s2, %s3
  %s5 = sld [smem:[#allocation0]]
  $region30: #{mean_bce_loss.1} parent=0
    _
  %s7 = ssub.s32 1, %s5
  %s8 = scalar_select 0, %s7, %s5
  // Predicated region
  $region2: #{mean_bce_loss.1} parent=0 // pred_check
    _
  $region3: #{mean_bce_loss.1} parent=0 // pred_check_branch
    %10 = sbr.rel (0) target = $region5
  $region4: #{mean_bce_loss.1} parent=0 // pred_region
    %s11 = sadd.s32 0, 0
    %s12 = smul.u32 2, %s11
    %p13 = scmp.lt.s32.totalorder %s12, 1
    %s14 = scalar_select %p13, %s12, 1
    %s15 = smul.addr %s14, 8
    %s16 = scalar_lea.vmem %s0, %s15
    %s17 = sadd.s32 0, 0
    %s18 = smul.u32 2, %s17
  $region5: #{mean_bce_loss.1} parent=0 // pred_fallthru
    _
  // Predicated region
  $region6: #{mean_bce_loss.1} parent=0 // pred_check
    _
  $region7: #{mean_bce_loss.1} parent=0 // pred_check_branch
    %20 = sbr.rel (0) target = $region9
  $region8: #{mean_bce_loss.1} parent=0 // pred_region
    %s21 = sadd.s32 0, 0
    %s22 = smul.u32 2, %s21
    %p23 = scmp.lt.s32.totalorder %s22, 1
    %s24 = scalar_select %p23, %s22, 1
    %s25 = smul.addr %s24, 8
    %s26 = scalar_lea.vmem %s1, %s25
    %s27 = sadd.s32 0, 0
    %s28 = smul.u32 2, %s27
  $region9: #{mean_bce_loss.1} parent=0 // pred_fallthru
    _
  %s29 = sadd.s32 0, 0
  %s30 = smul.u32 2, %s29
  %p31 = scmp.lt.s32.totalorder %s30, 1
  %s32 = scalar_select %p31, %s30, 1
  %s33 = smul.addr %s32, 8
  %s34 = scalar_lea.vmem %s0, %s33
  %s35 = sadd.s32 0, 0
  %s36 = smul.u32 2, %s35
  %p37 = scmp.lt.s32.totalorder %s36, 1
  %s38 = scalar_select %p37, %s36, 1
  %s39 = smul.addr %s38, 8
  %s40 = scalar_lea.vmem %s1, %s39
  %s41 = sadd.s32 0, 0
  %s42 = smul.u32 2, %s41
  %p43 = scmp.lt.s32.totalorder %s42, 1
  %s44 = scalar_select %p43, %s42, 1
  %s45 = smul.addr %s44, 8
  %s46 = scalar_lea.vmem %s0, %s45
  %s47 = sadd.s32 0, 0
  %s48 = smul.u32 2, %s47
  %s49 = sadd.s32 0, 0
  %s50 = smul.u32 2, %s49
  %p51 = scmp.lt.s32.totalorder %s50, 1
  %s52 = scalar_select %p51, %s50, 1
  %s53 = smul.addr %s52, 8
  %s54 = scalar_lea.vmem %s1, %s53
  %s55 = sadd.s32 0, 0
  %s56 = smul.u32 2, %s55
  %p57 = scmp.eq.s32.totalorder 0, 0
  // Predicated region
  $region10: #{mean_bce_loss.1} parent=0 // pred_check
    %p58 = pneg %p57
  $region11: #{mean_bce_loss.1} parent=0 // pred_check_branch
    %60 = sbr.rel (%p58) target = $region13
  $region12: #{mean_bce_loss.1} parent=0 // pred_region
    %61 = vst [vmem:[%s2] sm:$0xff] 0.0
    %62 = vst [vmem:[%s3] sm:$0xff] 0.0
  $region13: #{mean_bce_loss.1} parent=0 // pred_fallthru
    _
  %v63 = vld [vmem:[%s46] sm:$0xff]
  %v64 = vld [vmem:[%s46 + $0x8] sm:$0xff]
  %v65 = vld [vmem:[%s54] sm:$0xff]
  %v66 = vld [vmem:[%s54 + $0x8] sm:$0xff]
  %vm67 = vcmp.ge.f32.partialorder %v65, 0.0
  %vm68 = vcmp.ge.f32.partialorder %v66, 0.0
  %v69 = vlog2.pop %v63
  %v70 = vmul.f32 %v69, 0.6931472
  %v71 = vlog2.pop %v64
  %v72 = vmul.f32 %v71, 0.6931472
  %v73 = vmax.f32 %v70, -100.0
  %v74 = vmax.f32 %v72, -100.0
  %v75 = vsub.f32 1.0, %v63
  %v76 = vsub.f32 1.0, %v64
  %v77 = vlog2.pop %v75
  %v78 = vmul.f32 %v77, 0.6931472
  %v79 = vlog2.pop %v76
  %v80 = vmul.f32 %v79, 0.6931472
  %v81 = vmax.f32 %v78, -100.0
  %v82 = vmax.f32 %v80, -100.0
  %v83 = vsub.f32 %v73, %v81
  %v84 = vsub.f32 %v74, %v82
  %v85 = vmul.f32 %v65, %v83
  %v86 = vmul.f32 %v66, %v84
  %v87 = vadd.f32 %v81, %v85
  %v88 = vadd.f32 %v82, %v86
  %v89 = vsel %vm67, %v87, 0.0
  %v90 = vsel %vm68, %v88, 0.0
  %v91 = vld [vmem:[%s2] sm:$0xff]
  %v92 = vadd.f32 %v89, %v90
  %v93 = vadd.f32 %v91, %v92
  %94 = vst [vmem:[%s2] sm:$0xff] %v93
  %v95 = vld [vmem:[%s3] sm:$0xff]
  %v96 = vsel %vm67, 1, 0
  %v97 = vsel %vm68, 1, 0
  %v98 = vcvt.s32.f32 %v96
  %v99 = vcvt.s32.f32 %v97
  %v100 = vadd.f32 %v98, %v99
  %v101 = vadd.f32 %v95, %v100
  %102 = vst [vmem:[%s3] sm:$0xff] %v101
  // Predicated region
  $region14: #{mean_bce_loss.1} parent=0 // pred_check
    _
  $region15: #{mean_bce_loss.1} parent=0 // pred_check_branch
    %104 = sbr.rel (0) target = $region17
  $region16: #{mean_bce_loss.1} parent=0 // pred_region
    _
  $region17: #{mean_bce_loss.1} parent=0 // pred_fallthru
    _
  // Predicated region
  $region18: #{mean_bce_loss.1} parent=0 // pred_check
    _
  $region19: #{mean_bce_loss.1} parent=0 // pred_check_branch
    %106 = sbr.rel (0) target = $region21
  $region20: #{mean_bce_loss.1} parent=0 // pred_region
    _
  $region21: #{mean_bce_loss.1} parent=0 // pred_fallthru
    _
  // Predicated region
  $region22: #{mean_bce_loss.1} parent=0 // pred_check
    _
  $region23: #{mean_bce_loss.1} parent=0 // pred_check_branch
    %108 = sbr.rel (0) target = $region25
  $region24: #{mean_bce_loss.1} parent=0 // pred_region
    _
  $region25: #{mean_bce_loss.1} parent=0 // pred_fallthru
    _
  // Predicated region
  $region26: #{mean_bce_loss.1} parent=0 // pred_check
    _
  $region27: #{mean_bce_loss.1} parent=0 // pred_check_branch
    %110 = sbr.rel (0) target = $region29
  $region28: #{mean_bce_loss.1} parent=0 // pred_region
    _
  $region29: #{mean_bce_loss.1} parent=0 // pred_fallthru
    _

</llo_original>
